<compile_context>
chip_gen: v7x
topology: tpu7x:2x2x1
jax: 0.10.0
libtpu: 0.0.40
codegen_flags: <defaults>
</compile_context>

<pallas_src>
import jax
import jax.numpy as jnp
from jax.experimental import pallas as pl
from jax.experimental.pallas import tpu as pltpu


def _round_up(n, m):
    return ((n + m - 1) // m) * m


def _ffn_kernel(x_ref, w1_ref, b1_ref, w2_ref, b2_ref, o_ref, acc_ref):
    """Grid = (row_tiles, k_tiles over d_hidden).

    For one (row_tile, d_model_p) slab of rows and one d_hidden chunk:
      h_chunk = relu(x @ W1[:, k] + b1[k])          (row_tile, k_tile) f32
      acc    += h_chunk @ W2[k, :]                  (row_tile, d_model_p) f32
    b2 is folded into the accumulator init; result stored on the last k step.
    """
    k = pl.program_id(1)

    @pl.when(k == 0)
    def _():
        # Fold the second bias into the accumulator init (removes an
        # epilogue broadcast-add).
        acc_ref[...] = jnp.broadcast_to(
            b2_ref[...].astype(jnp.float32), acc_ref.shape
        )

    # First matmul: native-dtype operands, f32 accumulate on the MXU.
    h = jnp.dot(x_ref[...], w1_ref[...], preferred_element_type=jnp.float32)
    # Fused bias + ReLU epilogue (VPU filler under the matmuls).
    h = jnp.maximum(h + b1_ref[...].astype(jnp.float32), 0.0)

    # Second matmul: cast the chunk back to the weight dtype (fast MXU path);
    # accumulate in the f32 VMEM scratch.
    acc_ref[...] += jnp.dot(
        h.astype(w2_ref.dtype), w2_ref[...], preferred_element_type=jnp.float32
    )

    @pl.when(k == pl.num_programs(1) - 1)
    def _():
        o_ref[...] = acc_ref[...].astype(o_ref.dtype)


def feed_forward_network(x, w1, b1, w2, b2, *, compute_dtype=None):
    """
    x : (batch, seq, d_model)
    w1: (d_model, d_hidden)   b1: (d_hidden,)
    w2: (d_hidden, d_model)   b2: (d_model,)
    compute_dtype: optionally cast x/W1/W2 (e.g. jnp.bfloat16) for the fast
      MXU path; accumulation stays f32. Default None keeps input precision.
    returns (batch, seq, d_model) in x's original dtype.
    """
    batch, seq, d_model = x.shape
    d_hidden = w1.shape[1]
    orig_dtype = x.dtype

    if compute_dtype is not None:
        x = x.astype(compute_dtype)
        w1 = w1.astype(compute_dtype)
        w2 = w2.astype(compute_dtype)
    dtype = x.dtype
    item = jnp.dtype(dtype).itemsize

    m = batch * seq
    # Lane-dense last dims (multiples of 128) -> unmasked vector stores;
    # rows padded only to the sublane multiple (8).
    d_model_p = _round_up(d_model, 128)
    d_hidden_p = _round_up(d_hidden, 128)
    m8 = _round_up(max(m, 1), 8)

    # ---- physical VMEM (generation aware) ----------------------------------
    try:
        vmem_cap = int(pltpu.get_tpu_info().vmem_capacity_bytes)
    except Exception:  # conservative fallback (v7x-sized)
        vmem_cap = 64 << 20
    budget = vmem_cap - (16 << 20)  # headroom for compiler-internal scratch

    def est_vmem(rt, kt):
        return (
            2 * item * (rt * d_model_p      # x blocks (double buffered)
                        + d_model_p * kt    # W1 slab
                        + kt * d_model_p    # W2 slab
                        + rt * d_model_p)   # out blocks
            + 2 * 4 * (kt + d_model_p)      # b1 / b2 (tiny)
            + 4 * rt * d_model_p            # f32 accumulator scratch
        )

    # k_tile candidates: multiples of 128 that divide the 128-padded d_hidden
    # exactly (no wasted reduction columns), largest first.
    units = d_hidden_p // 128
    k_cands = sorted({128 * d for d in range(1, units + 1) if units % d == 0},
                     reverse=True)

    # Row-tile target from the per-generation roofline (FLOP/byte of streamed
    # weights ~ row_tile): 1024 on 128-MiB chips (v5e/v6e), 512 on 64-MiB v7x.
    row_target = 1024 if vmem_cap >= (100 << 20) else 512
    rt0 = min(_round_up(row_target, 8), m8)
    row_cands = []
    rt = rt0
    while rt >= 8:
        row_cands.append(rt)
        if rt == 8:
            break
        rt = max(8, _round_up(rt // 2, 8))

    row_tile = k_tile = None
    # Preferred path: weights fully resident (single k step) if it fits at a
    # reasonable row tile -> W1/W2 DMA'd exactly once for the whole call.
    for rt in row_cands:
        if rt < min(256, rt0):
            break
        if est_vmem(rt, d_hidden_p) <= budget:
            row_tile, k_tile = rt, d_hidden_p
            break
    if row_tile is None:
        # Streaming path: modest k_tile, keep the row tile as large as fits.
        k_stream_target = 512 if vmem_cap >= (100 << 20) else 256
        k_stream = next((k for k in k_cands if k <= k_stream_target), 128)
        for rt in row_cands:
            if est_vmem(rt, k_stream) <= budget:
                row_tile, k_tile = rt, k_stream
                break
    if row_tile is None:  # last-resort tiny tiles
        row_tile, k_tile = 8, 128

    # ---- zero-pad operands to the tiled shapes -----------------------------
    def pad2d(a, rows, cols):
        r, c = a.shape
        if r == rows and c == cols:
            return a
        return jnp.pad(a, ((0, rows - r), (0, cols - c)))

    x2d = pad2d(x.reshape(m, d_model), m8, d_model_p)
    w1p = pad2d(w1, d_model_p, d_hidden_p)
    b1p = pad2d(b1.reshape(1, d_hidden), 1, d_hidden_p)
    w2p = pad2d(w2, d_hidden_p, d_model_p)
    b2p = pad2d(b2.reshape(1, d_model), 1, d_model_p)

    grid = (pl.cdiv(m8, row_tile), d_hidden_p // k_tile)

    # ---- explicit VMEM limit, clamped to physical capacity -----------------
    vmem_limit = int(
        min(vmem_cap - (8 << 20),
            max(32 << 20, est_vmem(row_tile, k_tile) * 5 // 4 + (8 << 20)))
    )

    out2d = pl.pallas_call(
        _ffn_kernel,
        out_shape=jax.ShapeDtypeStruct((m8, d_model_p), orig_dtype),
        grid_spec=pltpu.PrefetchScalarGridSpec(
            num_scalar_prefetch=0,
            grid=grid,
            in_specs=[
                # rows slab: constant across the reduction axis
                pl.BlockSpec((row_tile, d_model_p), lambda i, k: (i, 0)),
                # W1 column slab for this d_hidden chunk
                pl.BlockSpec((d_model_p, k_tile), lambda i, k: (0, k)),
                # b1 chunk
                pl.BlockSpec((1, k_tile), lambda i, k: (0, k)),
                # W2 row slab for this d_hidden chunk
                pl.BlockSpec((k_tile, d_model_p), lambda i, k: (k, 0)),
                # b2 (full, tiny, loaded once)
                pl.BlockSpec((1, d_model_p), lambda i, k: (0, 0)),
            ],
            # Output block is constant across k -> resident accumulator target.
            out_specs=pl.BlockSpec((row_tile, d_model_p), lambda i, k: (i, 0)),
            scratch_shapes=[pltpu.VMEM((row_tile, d_model_p), jnp.float32)],
        ),
        compiler_params=pltpu.CompilerParams(
            dimension_semantics=("parallel", "arbitrary"),
            vmem_limit_bytes=vmem_limit,
        ),
    )(x2d, w1p, b1p, w2p, b2p)

    return out2d[:m, :d_model].reshape(batch, seq, d_model)


def init_params(key, d_model, d_hidden, dtype=jnp.float32):
    """Deterministic init matching nn.Linear's U(-1/sqrt(fan_in), 1/sqrt(fan_in))."""
    k1, k2, k3, k4 = jax.random.split(key, 4)
    bound1 = 1.0 / (d_model ** 0.5)
    bound2 = 1.0 / (d_hidden ** 0.5)
    # stored as (in_features, out_features): equivalent to torch weight.T
    w1 = jax.random.uniform(k1, (d_model, d_hidden), dtype, -bound1, bound1)
    b1 = jax.random.uniform(k2, (d_hidden,), dtype, -bound1, bound1)
    w2 = jax.random.uniform(k3, (d_hidden, d_model), dtype, -bound2, bound2)
    b2 = jax.random.uniform(k4, (d_model,), dtype, -bound2, bound2)
    return w1, b1, w2, b2


if __name__ == "__main__":
    d_model, d_hidden = 32, 64
    batch, seq = 2, 8

    key = jax.random.PRNGKey(0)
    kx, kp = jax.random.split(key)
    x = jax.random.normal(kx, (batch, seq, d_model), jnp.float32)
    w1, b1, w2, b2 = init_params(kp, d_model, d_hidden)

    out = feed_forward_network(x, w1, b1, w2, b2)
    out = jax.block_until_ready(out)

    # reference check in plain JAX
    ref = jnp.maximum(x @ w1 + b1, 0.0) @ w2 + b2
    assert out.shape == (batch, seq, d_model)
    assert jnp.allclose(out, ref, atol=1e-5, rtol=1e-5)

    print("KERNEL_OK")
</pallas_src>

<mosaic_0001>
module attributes {stable_mosaic.version = 11 : i64} {
  func.func @_ffn_kernel(%arg0: i32, %arg1: i32, %arg2: memref<16x128xf32, #tpu.memory_space<vmem>>, %arg3: memref<128x128xf32, #tpu.memory_space<vmem>>, %arg4: memref<1x128xf32, #tpu.memory_space<vmem>>, %arg5: memref<128x128xf32, #tpu.memory_space<vmem>>, %arg6: memref<1x128xf32, #tpu.memory_space<vmem>>, %arg7: memref<16x128xf32, #tpu.memory_space<vmem>>, %arg8: memref<16x128xf32, #tpu.memory_space<vmem>>) attributes {dimension_semantics = [#tpu.dimension_semantics<parallel>, #tpu.dimension_semantics<arbitrary>], iteration_bounds = array<i64: 1, 1>, scalar_prefetch = 0 : i64, scratch_operands = 1 : i64, tpu.core_type = #tpu.core_type<tc>, window_params = [{transform_indices = @transform_0, window_bounds = array<i64: 16, 128>}, {transform_indices = @transform_1, window_bounds = array<i64: 128, 128>}, {transform_indices = @transform_2, window_bounds = array<i64: 1, 128>}, {transform_indices = @transform_3, window_bounds = array<i64: 128, 128>}, {pipeline_mode = #tpu.pipeline_mode<synchronous>, transform_indices = @transform_4, window_bounds = array<i64: 1, 128>}, {transform_indices = @transform_5, window_bounds = array<i64: 16, 128>}]} {
    %c0_i32 = arith.constant 0 : i32
    %0 = arith.cmpi eq, %arg1, %c0_i32 : i32
    %1 = arith.extui %0 : i1 to i32
    %c0_i32_0 = arith.constant 0 : i32
    %2 = arith.cmpi ne, %1, %c0_i32_0 : i32
    scf.if %2 {
      %c0_16 = arith.constant 0 : index
      %c0_17 = arith.constant 0 : index
      %19 = vector.load %arg6[%c0_16, %c0_17] : memref<1x128xf32, #tpu.memory_space<vmem>>, vector<1x128xf32>
      %20 = vector.shape_cast %19 : vector<1x128xf32> to vector<1x128xf32>
      %21 = vector.broadcast %20 : vector<1x128xf32> to vector<16x128xf32>
      %c0_18 = arith.constant 0 : index
      %c0_19 = arith.constant 0 : index
      %22 = vector.load %arg8[%c0_18, %c0_19] : memref<16x128xf32, #tpu.memory_space<vmem>>, vector<16x128xf32>
      tpu.vector_store %arg8[%c0_18, %c0_19], %21 {strides = array<i32>} : memref<16x128xf32, #tpu.memory_space<vmem>>, vector<16x128xf32>,
    } else {
    }
    %c0 = arith.constant 0 : index
    %c0_1 = arith.constant 0 : index
    %3 = vector.load %arg2[%c0, %c0_1] : memref<16x128xf32, #tpu.memory_space<vmem>>, vector<16x128xf32>
    %c0_2 = arith.constant 0 : index
    %c0_3 = arith.constant 0 : index
    %4 = vector.load %arg3[%c0_2, %c0_3] : memref<128x128xf32, #tpu.memory_space<vmem>>, vector<128x128xf32>
    %cst = arith.constant dense<0.000000e+00> : vector<16x128xf32>
    %5 = tpu.matmul %3, %4, %cst {dimension_numbers = #tpu.dot_dimension_numbers<[1], [0], [0], [1], [0, 0, 1, 1], [], []>} : vector<16x128xf32>, vector<128x128xf32>, vector<16x128xf32> -> vector<16x128xf32>
    %c0_4 = arith.constant 0 : index
    %c0_5 = arith.constant 0 : index
    %6 = vector.load %arg4[%c0_4, %c0_5] : memref<1x128xf32, #tpu.memory_space<vmem>>, vector<1x128xf32>
    %7 = vector.broadcast %6 : vector<1x128xf32> to vector<16x128xf32>
    %8 = arith.addf %5, %7 : vector<16x128xf32>
    %cst_6 = arith.constant 0.000000e+00 : f32
    %9 = vector.broadcast %cst_6 : f32 to vector<16x128xf32>
    %10 = arith.maximumf %8, %9 : vector<16x128xf32>
    %c0_7 = arith.constant 0 : index
    %c0_8 = arith.constant 0 : index
    %11 = vector.load %arg8[%c0_7, %c0_8] : memref<16x128xf32, #tpu.memory_space<vmem>>, vector<16x128xf32>
    %c0_9 = arith.constant 0 : index
    %c0_10 = arith.constant 0 : index
    %12 = vector.load %arg5[%c0_9, %c0_10] : memref<128x128xf32, #tpu.memory_space<vmem>>, vector<128x128xf32>
    %cst_11 = arith.constant dense<0.000000e+00> : vector<16x128xf32>
    %13 = tpu.matmul %10, %12, %cst_11 {dimension_numbers = #tpu.dot_dimension_numbers<[1], [0], [0], [1], [0, 0, 1, 1], [], []>} : vector<16x128xf32>, vector<128x128xf32>, vector<16x128xf32> -> vector<16x128xf32>
    %14 = arith.addf %11, %13 : vector<16x128xf32>
    %c0_12 = arith.constant 0 : index
    %c0_13 = arith.constant 0 : index
    %15 = vector.load %arg8[%c0_12, %c0_13] : memref<16x128xf32, #tpu.memory_space<vmem>>, vector<16x128xf32>
    tpu.vector_store %arg8[%c0_12, %c0_13], %14 {strides = array<i32>} : memref<16x128xf32, #tpu.memory_space<vmem>>, vector<16x128xf32>,
    %c0_i32_14 = arith.constant 0 : i32
    %16 = arith.cmpi eq, %arg1, %c0_i32_14 : i32
    %17 = arith.extui %16 : i1 to i32
    %c0_i32_15 = arith.constant 0 : i32
    %18 = arith.cmpi ne, %17, %c0_i32_15 : i32
    scf.if %18 {
      %c0_16 = arith.constant 0 : index
      %c0_17 = arith.constant 0 : index
      %19 = vector.load %arg8[%c0_16, %c0_17] : memref<16x128xf32, #tpu.memory_space<vmem>>, vector<16x128xf32>
      %c0_18 = arith.constant 0 : index
      %c0_19 = arith.constant 0 : index
      %20 = vector.load %arg7[%c0_18, %c0_19] : memref<16x128xf32, #tpu.memory_space<vmem>>, vector<16x128xf32>
      tpu.vector_store %arg7[%c0_18, %c0_19], %19 {strides = array<i32>} : memref<16x128xf32, #tpu.memory_space<vmem>>, vector<16x128xf32>,
    } else {
    }
    return
  }
  func.func @transform_0(%arg0: i32, %arg1: i32) -> (i32, i32) {
    %c0_i32 = arith.constant 0 : i32
    %c0_i32_0 = arith.constant 0 : i32
    return %arg0, %c0_i32 : i32, i32
  }
  func.func @transform_1(%arg0: i32, %arg1: i32) -> (i32, i32) {
    %c0_i32 = arith.constant 0 : i32
    %c0_i32_0 = arith.constant 0 : i32
    return %c0_i32, %arg1 : i32, i32
  }
  func.func @transform_2(%arg0: i32, %arg1: i32) -> (i32, i32) {
    %c0_i32 = arith.constant 0 : i32
    %c0_i32_0 = arith.constant 0 : i32
    return %c0_i32, %arg1 : i32, i32
  }
  func.func @transform_3(%arg0: i32, %arg1: i32) -> (i32, i32) {
    %c0_i32 = arith.constant 0 : i32
    %c0_i32_0 = arith.constant 0 : i32
    return %arg1, %c0_i32 : i32, i32
  }
  func.func @transform_4(%arg0: i32, %arg1: i32) -> (i32, i32) {
    %c0_i32 = arith.constant 0 : i32
    %c0_i32_0 = arith.constant 0 : i32
    %c0_i32_1 = arith.constant 0 : i32
    return %c0_i32, %c0_i32_0 : i32, i32
  }
  func.func @transform_5(%arg0: i32, %arg1: i32) -> (i32, i32) {
    %c0_i32 = arith.constant 0 : i32
    %c0_i32_0 = arith.constant 0 : i32
    return %arg0, %c0_i32 : i32, i32
  }
}

</mosaic_0001>

<llo_original>
// kernel: tpu_custom_call.1
$region0: #{tpu_custom_call.1}
  #allocation0 [shape = 'u32[]', space=smem, size = 0x4, offset = 0x4, fixed_abs, tag = 'smem constant byte address 0x4 - core index']
  #allocation1 [shape = 'u32[144,128]{1,0:T(1,128)}', space=vmem, size = 0x12000, scoped, tag = 'internal scratch']
  #allocation2 [shape = 'f32[16,128]{1,0:T(8,128)}', space=vmem, size = 0x2000, scoped, tag = 'scratch operand']
  %s0 = inlined_call_operand.hbm [shape: f32[16,128], index: 0, kind: input, shape index: {}]
  %s1 = inlined_call_operand.hbm [shape: f32[128,128], index: 1, kind: input, shape index: {}]
  %s2 = inlined_call_operand.vmem [shape: f32[1,128], index: 2, kind: input, shape index: {}]
  %s3 = inlined_call_operand.hbm [shape: f32[128,128], index: 3, kind: input, shape index: {}]
  %s4 = inlined_call_operand.vmem [shape: f32[1,128], index: 4, kind: input, shape index: {}]
  %s5 = inlined_call_operand.hbm [shape: f32[16,128], index: 5, kind: output, shape index: {}]
  %s6 = sld [smem:[#allocation0]]
  $region50: #{tpu_custom_call.1} parent=0
    _
  %s8 = ssub.s32 1, %s6
  %s9 = scalar_select 0, %s8, %s6
  $region1: #{tpu_custom_call.1} parent=0
    #allocation3 [shape = 'u8[8192]{0}', space=vmem, size = 0x2000, scoped, tag = 'input window, operand 0, single buffered']
    #allocation4 [shape = 's32[1]{0}', space=sflag, size = 0x4, scoped, tag = 'scoped memory for tpu_custom_call.1']
    #allocation5 [shape = 's32[1]{0}', space=sflag, size = 0x4, scoped, tag = 'scoped memory for tpu_custom_call.1']
    #allocation6 [shape = 'u8[65536]{0}', space=vmem, size = 0x10000, scoped, tag = 'input window, operand 1, single buffered']
    #allocation7 [shape = 's32[1]{0}', space=sflag, size = 0x4, scoped, tag = 'scoped memory for tpu_custom_call.1']
    #allocation8 [shape = 'u8[65536]{0}', space=vmem, size = 0x10000, scoped, tag = 'input window, operand 3, single buffered']
    #allocation9 [shape = 'u8[8192]{0}', space=vmem, size = 0x2000, scoped, tag = 'output window, operand 0, single buffered']
    %10 = vsyncpa [#allocation4], 0
    %11 = vsyncpa [#allocation7], 0
    %12 = vsyncpa [#allocation5], 0
    // Predicated region
    $region2: #{tpu_custom_call.1} parent=1 // pred_check
      _
    $region3: #{tpu_custom_call.1} parent=1 // pred_check_branch
      %14 = sbr.rel (0) target = $region5
    $region4: #{tpu_custom_call.1} parent=1 // pred_region
      %s16 = ssub.s32 256, 256
      %17 = vsyncadd [#allocation4], %s16
      %s18 = sshll.u32 [#allocation3], 4
      %s19 = int_to_ptr.vmem [resolvable:$true] %s18
      %24 = dma.hbm_to_vmem [thread:$0]  %s0, 256, %s19, [#allocation4], 128, 128, 8
    $region5: #{tpu_custom_call.1} parent=1 // pred_fallthru
      _
    // Predicated region
    $region6: #{tpu_custom_call.1} parent=1 // pred_check
      _
    $region7: #{tpu_custom_call.1} parent=1 // pred_check_branch
      %26 = sbr.rel (0) target = $region9
    $region8: #{tpu_custom_call.1} parent=1 // pred_region
      %s28 = ssub.s32 2048, 2048
      %29 = vsyncadd [#allocation7], %s28
      %s30 = sshll.u32 [#allocation6], 4
      %s31 = int_to_ptr.vmem [resolvable:$true] %s30
      %36 = dma.hbm_to_vmem [thread:$0]  %s1, 2048, %s31, [#allocation7], 128, 128, 8
    $region9: #{tpu_custom_call.1} parent=1 // pred_fallthru
      _
    // Predicated region
    $region10: #{tpu_custom_call.1} parent=1 // pred_check
      _
    $region11: #{tpu_custom_call.1} parent=1 // pred_check_branch
      %38 = sbr.rel (0) target = $region13
    $region12: #{tpu_custom_call.1} parent=1 // pred_region
      _
    $region13: #{tpu_custom_call.1} parent=1 // pred_fallthru
      _
    // Predicated region
    $region14: #{tpu_custom_call.1} parent=1 // pred_check
      _
    $region15: #{tpu_custom_call.1} parent=1 // pred_check_branch
      %40 = sbr.rel (0) target = $region17
    $region16: #{tpu_custom_call.1} parent=1 // pred_region
      %s42 = ssub.s32 2048, 2048
      %43 = vsyncadd [#allocation7], %s42
      %s44 = sshll.u32 [#allocation8], 4
      %s45 = int_to_ptr.vmem [resolvable:$true] %s44
      %50 = dma.hbm_to_vmem [thread:$0]  %s3, 2048, %s45, [#allocation7], 128, 128, 8
    $region17: #{tpu_custom_call.1} parent=1 // pred_fallthru
      _
    // Predicated region
    $region18: #{tpu_custom_call.1} parent=1 // pred_check
      _
    $region19: #{tpu_custom_call.1} parent=1 // pred_check_branch
      %52 = sbr.rel (0) target = $region21
    $region20: #{tpu_custom_call.1} parent=1 // pred_region
      _
    $region21: #{tpu_custom_call.1} parent=1 // pred_fallthru
      _
    // Predicated region
    $region22: #{tpu_custom_call.1} parent=1 // pred_check
      _
    $region23: #{tpu_custom_call.1} parent=1 // pred_check_branch
      %54 = sbr.rel (0) target = $region25
    $region24: #{tpu_custom_call.1} parent=1 // pred_region
      %55 = dma.done [#allocation4], 256
    $region25: #{tpu_custom_call.1} parent=1 // pred_fallthru
      _
    // Predicated region
    $region26: #{tpu_custom_call.1} parent=1 // pred_check
      _
    $region27: #{tpu_custom_call.1} parent=1 // pred_check_branch
      %57 = sbr.rel (0) target = $region29
    $region28: #{tpu_custom_call.1} parent=1 // pred_region
      %58 = dma.done [#allocation7], 2048
    $region29: #{tpu_custom_call.1} parent=1 // pred_fallthru
      _
    // Predicated region
    $region30: #{tpu_custom_call.1} parent=1 // pred_check
      _
    $region31: #{tpu_custom_call.1} parent=1 // pred_check_branch
      %60 = sbr.rel (0) target = $region33
    $region32: #{tpu_custom_call.1} parent=1 // pred_region
      %61 = dma.done [#allocation7], 2048
    $region33: #{tpu_custom_call.1} parent=1 // pred_fallthru
      _
    %p62 = scmp.eq.s32.totalorder 0, 0
    // Predicated region
    $region34: #{tpu_custom_call.1} parent=1 // pred_check
      %p63 = pneg %p62
    $region35: #{tpu_custom_call.1} parent=1 // pred_check_branch
      %65 = sbr.rel (%p63) target = $region37
    $region36: #{tpu_custom_call.1} parent=1 // pred_region
      %v66 = vld [vmem:[%s4] sm:$0x1]
      %v68 = vlaneseq
      %v69 = vshrl.u32 %v68, 7
      %v70 = vsub.s32 0, %v69
      %v71 = vrot.slane %v66, %v70
      %73 = vst [vmem:[#allocation2] sm:$0xff] %v71
      %74 = vst [vmem:[#allocation2 + $0x8] sm:$0xff] %v71
    $region37: #{tpu_custom_call.1} parent=1 // pred_fallthru
      _
    %v75 = vld [vmem:[#allocation3] sm:$0xff]
    %v76 = vld [vmem:[#allocation3 + $0x8] sm:$0xff]
    %v77 = vld [vmem:[#allocation6] sm:$0xff]
    %v78 = vld [vmem:[#allocation6 + $0x8] sm:$0xff]
    %v79 = vld [vmem:[#allocation6 + $0x10] sm:$0xff]
    %v80 = vld [vmem:[#allocation6 + $0x18] sm:$0xff]
    %v81 = vld [vmem:[#allocation6 + $0x20] sm:$0xff]
    %v82 = vld [vmem:[#allocation6 + $0x28] sm:$0xff]
    %v83 = vld [vmem:[#allocation6 + $0x30] sm:$0xff]
    %v84 = vld [vmem:[#allocation6 + $0x38] sm:$0xff]
    %v85 = vld [vmem:[#allocation6 + $0x40] sm:$0xff]
    %v86 = vld [vmem:[#allocation6 + $0x48] sm:$0xff]
    %v87 = vld [vmem:[#allocation6 + $0x50] sm:$0xff]
    %v88 = vld [vmem:[#allocation6 + $0x58] sm:$0xff]
    %v89 = vld [vmem:[#allocation6 + $0x60] sm:$0xff]
    %v90 = vld [vmem:[#allocation6 + $0x68] sm:$0xff]
    %v91 = vld [vmem:[#allocation6 + $0x70] sm:$0xff]
    %v92 = vld [vmem:[#allocation6 + $0x78] sm:$0xff]
    %v93 = vld [vmem:[%s2] sm:$0x1]
    %v95 = vlaneseq
    %v96 = vshrl.u32 %v95, 7
    %v97 = vsub.s32 0, %v96
    %v98 = vrot.slane %v93, %v97
    %100 = vmatprep.subr.mxu0 0.0
    %101 = vmatpush1.msra.mxu0 %v77
    %102 = vmatprep.subr.mxu0 0.0
    %103 = vmatpush1.msra.mxu0 %v78
    %104 = vmatprep.subr.mxu0 0.0
    %105 = vmatpush1.msra.mxu0 %v79
    %106 = vmatprep.subr.mxu0 0.0
    %107 = vmatpush1.msra.mxu0 %v80
    %108 = vmatprep.subr.mxu0 0.0
    %109 = vmatpush1.msra.mxu0 %v81
    %110 = vmatprep.subr.mxu0 0.0
    %111 = vmatpush1.msra.mxu0 %v82
    %112 = vmatprep.subr.mxu0 0.0
    %113 = vmatpush1.msra.mxu0 %v83
    %114 = vmatprep.subr.mxu0 0.0
    %115 = vmatpush1.msra.mxu0 %v84
    %116 = vmatprep.subr.mxu0 0.0
    %117 = vmatpush1.msra.mxu0 %v85
    %118 = vmatprep.subr.mxu0 0.0
    %119 = vmatpush1.msra.mxu0 %v86
    %120 = vmatprep.subr.mxu0 0.0
    %121 = vmatpush1.msra.mxu0 %v87
    %122 = vmatprep.subr.mxu0 0.0
    %123 = vmatpush1.msra.mxu0 %v88
    %124 = vmatprep.subr.mxu0 0.0
    %125 = vmatpush1.msra.mxu0 %v89
    %126 = vmatprep.subr.mxu0 0.0
    %127 = vmatpush1.msra.mxu0 %v90
    %128 = vmatprep.subr.mxu0 0.0
    %129 = vmatpush1.msra.mxu0 %v91
    %130 = vmatprep.subr.mxu0 0.0
    %131 = vmatpush1.msra.mxu0 %v92
    %132 = vmatprep.subr.mxu0 0.0
    %133 = vmatpush1.msra.mxu0 0.0
    %134 = vmatprep.subr.mxu0 0.0
    %135 = vmatpush1.msra.mxu0 0.0
    %136 = vmatprep.subr.mxu0 0.0
    %137 = vmatpush1.msra.mxu0 0.0
    %138 = vmatprep.subr.mxu0 0.0
    %139 = vmatpush1.msra.mxu0 0.0
    %140 = vmatprep.subr.mxu0 0.0
    %141 = vmatpush1.msra.mxu0 0.0
    %142 = vmatprep.subr.mxu0 0.0
    %143 = vmatpush1.msra.mxu0 0.0
    %144 = vmatprep.subr.mxu0 0.0
    %145 = vmatpush1.msra.mxu0 0.0
    %146 = vmatprep.subr.mxu0 0.0
    %147 = vmatpush1.msra.mxu0 0.0
    %148 = vmatprep.subr.mxu0 0.0
    %149 = vmatpush1.msra.mxu0 0.0
    %150 = vmatprep.subr.mxu0 0.0
    %151 = vmatpush1.msra.mxu0 0.0
    %152 = vmatprep.subr.mxu0 0.0
    %153 = vmatpush1.msra.mxu0 0.0
    %154 = vmatprep.subr.mxu0 0.0
    %155 = vmatpush1.msra.mxu0 0.0
    %156 = vmatprep.subr.mxu0 0.0
    %157 = vmatpush1.msra.mxu0 0.0
    %158 = vmatprep.subr.mxu0 0.0
    %159 = vmatpush1.msra.mxu0 0.0
    %160 = vmatprep.subr.mxu0 0.0
    %161 = vmatpush1.msra.mxu0 0.0
    %162 = vmatprep.subr.mxu0 0.0
    %163 = vmatpush1.msra.mxu0 0.0
    %164 = vmatprep.mubr.f32.mxu0 0.0
    %165 = vmatmul.mubr.f32.gmra.mrb[0].mxu0 %v75
    %v166 = vpop.f32.mrb[0].mxu0
    %v167 = vadd.f32 %v98, %v166
    %v168 = vpop.f32.mrb[0].mxu0
    %169 = vmatprep.mubr.f32.mxu0 0.0
    %170 = vmatmul.mubr.f32.gmra.mrb[0].mxu0 %v76
    %v171 = vpop.f32.mrb[0].mxu0
    %v172 = vadd.f32 %v98, %v171
    %v173 = vpop.f32.mrb[0].mxu0
    %174 = vdwg.mxu0
    %v175 = vmax.f32 %v167, 0.0
    %v176 = vmax.f32 %v172, 0.0
    %v177 = vld [vmem:[#allocation2] sm:$0xff]
    %v178 = vld [vmem:[#allocation2 + $0x8] sm:$0xff]
    %v179 = vld [vmem:[#allocation8] sm:$0xff]
    %v180 = vld [vmem:[#allocation8 + $0x8] sm:$0xff]
    %v181 = vld [vmem:[#allocation8 + $0x10] sm:$0xff]
    %v182 = vld [vmem:[#allocation8 + $0x18] sm:$0xff]
    %v183 = vld [vmem:[#allocation8 + $0x20] sm:$0xff]
    %v184 = vld [vmem:[#allocation8 + $0x28] sm:$0xff]
    %v185 = vld [vmem:[#allocation8 + $0x30] sm:$0xff]
    %v186 = vld [vmem:[#allocation8 + $0x38] sm:$0xff]
    %v187 = vld [vmem:[#allocation8 + $0x40] sm:$0xff]
    %v188 = vld [vmem:[#allocation8 + $0x48] sm:$0xff]
    %v189 = vld [vmem:[#allocation8 + $0x50] sm:$0xff]
    %v190 = vld [vmem:[#allocation8 + $0x58] sm:$0xff]
    %v191 = vld [vmem:[#allocation8 + $0x60] sm:$0xff]
    %v192 = vld [vmem:[#allocation8 + $0x68] sm:$0xff]
    %v193 = vld [vmem:[#allocation8 + $0x70] sm:$0xff]
    %v194 = vld [vmem:[#allocation8 + $0x78] sm:$0xff]
    %195 = vmatprep.subr.mxu0 0.0
    %196 = vmatpush1.msra.mxu0 %v179
    %197 = vmatprep.subr.mxu0 0.0
    %198 = vmatpush1.msra.mxu0 %v180
    %199 = vmatprep.subr.mxu0 0.0
    %200 = vmatpush1.msra.mxu0 %v181
    %201 = vmatprep.subr.mxu0 0.0
    %202 = vmatpush1.msra.mxu0 %v182
    %203 = vmatprep.subr.mxu0 0.0
    %204 = vmatpush1.msra.mxu0 %v183
    %205 = vmatprep.subr.mxu0 0.0
    %206 = vmatpush1.msra.mxu0 %v184
    %207 = vmatprep.subr.mxu0 0.0
    %208 = vmatpush1.msra.mxu0 %v185
    %209 = vmatprep.subr.mxu0 0.0
    %210 = vmatpush1.msra.mxu0 %v186
    %211 = vmatprep.subr.mxu0 0.0
    %212 = vmatpush1.msra.mxu0 %v187
    %213 = vmatprep.subr.mxu0 0.0
    %214 = vmatpush1.msra.mxu0 %v188
    %215 = vmatprep.subr.mxu0 0.0
    %216 = vmatpush1.msra.mxu0 %v189
    %217 = vmatprep.subr.mxu0 0.0
    %218 = vmatpush1.msra.mxu0 %v190
    %219 = vmatprep.subr.mxu0 0.0
    %220 = vmatpush1.msra.mxu0 %v191
    %221 = vmatprep.subr.mxu0 0.0
    %222 = vmatpush1.msra.mxu0 %v192
    %223 = vmatprep.subr.mxu0 0.0
    %224 = vmatpush1.msra.mxu0 %v193
    %225 = vmatprep.subr.mxu0 0.0
    %226 = vmatpush1.msra.mxu0 %v194
    %227 = vmatprep.subr.mxu0 0.0
    %228 = vmatpush1.msra.mxu0 0.0
    %229 = vmatprep.subr.mxu0 0.0
    %230 = vmatpush1.msra.mxu0 0.0
    %231 = vmatprep.subr.mxu0 0.0
    %232 = vmatpush1.msra.mxu0 0.0
    %233 = vmatprep.subr.mxu0 0.0
    %234 = vmatpush1.msra.mxu0 0.0
    %235 = vmatprep.subr.mxu0 0.0
    %236 = vmatpush1.msra.mxu0 0.0
    %237 = vmatprep.subr.mxu0 0.0
    %238 = vmatpush1.msra.mxu0 0.0
    %239 = vmatprep.subr.mxu0 0.0
    %240 = vmatpush1.msra.mxu0 0.0
    %241 = vmatprep.subr.mxu0 0.0
    %242 = vmatpush1.msra.mxu0 0.0
    %243 = vmatprep.subr.mxu0 0.0
    %244 = vmatpush1.msra.mxu0 0.0
    %245 = vmatprep.subr.mxu0 0.0
    %246 = vmatpush1.msra.mxu0 0.0
    %247 = vmatprep.subr.mxu0 0.0
    %248 = vmatpush1.msra.mxu0 0.0
    %249 = vmatprep.subr.mxu0 0.0
    %250 = vmatpush1.msra.mxu0 0.0
    %251 = vmatprep.subr.mxu0 0.0
    %252 = vmatpush1.msra.mxu0 0.0
    %253 = vmatprep.subr.mxu0 0.0
    %254 = vmatpush1.msra.mxu0 0.0
    %255 = vmatprep.subr.mxu0 0.0
    %256 = vmatpush1.msra.mxu0 0.0
    %257 = vmatprep.subr.mxu0 0.0
    %258 = vmatpush1.msra.mxu0 0.0
    %259 = vmatprep.mubr.f32.mxu0 0.0
    %260 = vmatmul.mubr.f32.gmra.mrb[0].mxu0 %v175
    %v261 = vpop.f32.mrb[0].mxu0
    %v262 = vadd.f32 0.0, %v261
    %v263 = vpop.f32.mrb[0].mxu0
    %264 = vmatprep.mubr.f32.mxu0 0.0
    %265 = vmatmul.mubr.f32.gmra.mrb[0].mxu0 %v176
    %v266 = vpop.f32.mrb[0].mxu0
    %v267 = vadd.f32 0.0, %v266
    %v268 = vpop.f32.mrb[0].mxu0
    %269 = vdwg.mxu0
    %v270 = vadd.f32 %v177, %v262
    %v271 = vadd.f32 %v178, %v267
    %272 = vst [vmem:[#allocation2] sm:$0xff] %v270
    %273 = vst [vmem:[#allocation2 + $0x8] sm:$0xff] %v271
    // Predicated region
    $region38: #{tpu_custom_call.1} parent=1 // pred_check
      %p274 = pneg %p62
    $region39: #{tpu_custom_call.1} parent=1 // pred_check_branch
      %276 = sbr.rel (%p274) target = $region41
    $region40: #{tpu_custom_call.1} parent=1 // pred_region
      %v277 = vld [vmem:[#allocation2] sm:$0xff]
      %v278 = vld [vmem:[#allocation2 + $0x8] sm:$0xff]
      %279 = vst [vmem:[#allocation9] sm:$0xff] %v277
      %280 = vst [vmem:[#allocation9 + $0x8] sm:$0xff] %v278
    $region41: #{tpu_custom_call.1} parent=1 // pred_fallthru
      _
    // Predicated region
    $region42: #{tpu_custom_call.1} parent=1 // pred_check
      _
    $region43: #{tpu_custom_call.1} parent=1 // pred_check_branch
      %282 = sbr.rel (0) target = $region45
    $region44: #{tpu_custom_call.1} parent=1 // pred_region
      %s284 = ssub.s32 256, 256
      %285 = vsyncadd [#allocation5], %s284
      %s286 = sshll.u32 [#allocation9], 4
      %s287 = int_to_ptr.vmem [resolvable:$true] %s286
      %292 = dma.vmem_to_hbm [thread:$0]  %s287, 256, %s5, [#allocation5], 128, 128, 8
    $region45: #{tpu_custom_call.1} parent=1 // pred_fallthru
      _
    // Predicated region
    $region46: #{tpu_custom_call.1} parent=1 // pred_check
      _
    $region47: #{tpu_custom_call.1} parent=1 // pred_check_branch
      %294 = sbr.rel (0) target = $region49
    $region48: #{tpu_custom_call.1} parent=1 // pred_region
      %295 = dma.done [#allocation5], 256
    $region49: #{tpu_custom_call.1} parent=1 // pred_fallthru
      _
    %296 = vsyncpa [#allocation4], 1
    %297 = vsyncpa [#allocation7], 1
    %298 = vsyncpa [#allocation5], 1

</llo_original>
